<compile_context>
chip_gen: v7x
topology: tpu7x:2x2x1
jax: 0.10.0
libtpu: 0.0.40
codegen_flags: <defaults>
</compile_context>

<pallas_src>
import math

import jax
import jax.numpy as jnp
from jax import lax
from jax.experimental import pallas as pl
from jax.experimental.pallas import tpu as pltpu

_LANE = 128


def _make_li_kernel(t_seq: int, k: int, lane_len: int):
    """Kernel for one (B_blk, R_blk, lane_len) block.

    Each row of `lane_len` lanes holds `k` independent sequences of `t_seq`
    time steps (lane j -> feature j // t_seq, time j % t_seq).  The first-order
    linear recurrence is evaluated with a Hillis–Steele scan over the lane
    (time) axis: u <- u + tau^d * shift_by_d(u) for d = 1, 2, 4, ...
    """
    n_rounds = (t_seq - 1).bit_length() if t_seq > 1 else 0

    def kernel(x_ref, tau_ref, o_ref):
        x = x_ref[...].astype(jnp.float32)                 # (Bb, Rb, L)
        tau_c = tau_ref[...].astype(jnp.float32)           # (Rb, k)
        lane = lax.broadcasted_iota(jnp.int32, (1, 1, lane_len), 2)

        if k == 1:
            pos = lane                                     # time index per lane
            tau = tau_c[None]                              # (1, Rb, 1) -> bcast over B, T
        else:
            # Expand tau to per-lane values and build the per-lane time index
            # without integer div/mod (k static select rounds, exact).  This is
            # computed once per block and reused for every batch row in the
            # block, so no (B, F) tau broadcast ever touches HBM.
            pos = lane
            tau = jnp.where(lane < t_seq, tau_c[:, 0:1][None], 0.0)
            for i in range(1, k):
                lo = i * t_seq
                seg = (lane >= lo) & (lane < lo + t_seq)
                pos = jnp.where(lane >= lo, lane - lo, pos)
                tau = jnp.where(seg, tau_c[:, i:i + 1][None], tau)

        # log2(T)-round scan along lanes; the `pos >= d` mask both zero-fills
        # the shift and prevents mixing across packed sequence boundaries.
        u = x
        taud = tau                                         # tau^d
        d = 1
        for rnd in range(n_rounds):
            w = jnp.where(pos >= d, taud, 0.0)
            u = u + w * pltpu.roll(u, shift=d, axis=2)
            d *= 2
            if rnd + 1 < n_rounds:
                taud = taud * taud

        o_ref[...] = u.astype(o_ref.dtype)                 # output in input dtype

    return kernel


def li_no_spike(x, tau, constrain_method="forward"):
    """JAX/Pallas equivalent of LI_no_Spike.forward.

    x   : (B, *feat_shape, T)   time on the LAST axis
    tau : (*feat_shape,)
    """
    if constrain_method == "forward":
        tau = jnp.clip(tau, 0.0, 1.0)
    elif constrain_method == "always":
        # TODO(synk): in-place parameter mutation (`self.tau.data = ...`) has no
        # functional equivalent; the clamped value is simply used here.
        tau = jnp.clip(tau, 0.0, 1.0)
    # 'none' / 'eval': use tau as-is.

    B = x.shape[0]
    T = x.shape[-1]
    feat_shape = x.shape[1:-1]
    F = math.prod(feat_shape)

    # ---- lane packing: k whole sequences per row (k | F, k*T <= 128) ----
    if T >= _LANE:
        k = 1
    else:
        k = 1
        for cand in range(min(_LANE // T, F), 0, -1):
            if F % cand == 0:
                k = cand
                break
    L = k * T
    R = F // k

    x_v = x.reshape(B, R, L)                      # free reshape (contiguous dims)
    tau_c = tau.reshape(R, k).astype(jnp.float32)

    # ---- tile sizing (blocks ~2 MiB, resident well under VMEM limits) ----
    itemsize = jnp.dtype(x.dtype).itemsize
    mult = max(8, 32 // itemsize)                 # sublane multiple per dtype
    row_bytes = pl.cdiv(L, _LANE) * _LANE * 4     # f32 VMEM footprint per row
    target = 2 * 1024 * 1024

    B_blk = B
    if B * mult * row_bytes > target:
        B_blk = max(1, target // (mult * row_bytes))
    if R <= mult:
        R_blk = R
    else:
        R_blk = max(mult, min(R, (target // (B_blk * row_bytes) // mult) * mult))
        if R_blk >= R:
            R_blk = R
    # Expose a parallel grid axis (2nd TensorCore on v7x) even when everything
    # would fit in a single block.
    if pl.cdiv(R, R_blk) * pl.cdiv(B, B_blk) == 1 and R >= 2 * mult:
        R_blk = ((R + 1) // 2 + mult - 1) // mult * mult
    n_r = pl.cdiv(R, R_blk)
    n_b = pl.cdiv(B, B_blk)

    n_rounds = (T - 1).bit_length() if T > 1 else 0
    cost = pl.CostEstimate(
        flops=int((3 * n_rounds + 2) * B * F * T),
        transcendentals=0,
        bytes_accessed=int(2 * B * F * T * itemsize + R * k * 4),
    )

    kernel = _make_li_kernel(T, k, L)

    out = pl.pallas_call(
        kernel,
        out_shape=jax.ShapeDtypeStruct((B, R, L), x.dtype),
        grid_spec=pltpu.PrefetchScalarGridSpec(
            num_scalar_prefetch=0,
            grid=(n_r, n_b),
            in_specs=[
                pl.BlockSpec((B_blk, R_blk, L), lambda r, b: (b, r, 0)),
                pl.BlockSpec((R_blk, k), lambda r, b: (r, 0)),
            ],
            out_specs=pl.BlockSpec((B_blk, R_blk, L), lambda r, b: (b, r, 0)),
        ),
        compiler_params=pltpu.CompilerParams(
            dimension_semantics=("parallel", "parallel"),
            vmem_limit_bytes=48 * 1024 * 1024,
        ),
        cost_estimate=cost,
    )(x_v, tau_c)

    return out.reshape(B, *feat_shape, T)


def li_no_spike_ref(x, tau, constrain_method="forward"):
    """Pure-JAX reference matching the PyTorch forward loop."""
    if constrain_method in ("forward", "always"):
        tau = jnp.clip(tau, 0.0, 1.0)
    u = jnp.zeros(x.shape[:-1], dtype=jnp.float32)

    def step(u, x_t):
        u_new = tau * u + x_t
        return u_new, u_new

    xs = jnp.moveaxis(x.astype(jnp.float32), -1, 0)  # (T, ...)
    _, outs = jax.lax.scan(step, u, xs)
    return jnp.moveaxis(outs, 0, -1)


if __name__ == "__main__":
    # Module hyperparameters (synthetic, deterministic init).
    tau_mean = 0.5
    tau_init_range = 0.2
    inpshape = (4, 16, 16)        # (C, H, W)  == x.shape[1:-1]
    B, T = 2, 8
    x_shape = (B, *inpshape, T)   # (2, 4, 16, 16, 8), time on last axis

    key = jax.random.PRNGKey(0)
    k_x, k_tau = jax.random.split(key)

    x = jax.random.normal(k_x, x_shape, dtype=jnp.float32)
    # nn.init.uniform_(tau, tau - range/2, tau + range/2)
    tau = jax.random.uniform(
        k_tau, inpshape, dtype=jnp.float32,
        minval=tau_mean - tau_init_range / 2,
        maxval=tau_mean + tau_init_range / 2,
    )

    out = li_no_spike(x, tau, constrain_method="forward")
    out = jax.block_until_ready(out)

    ref = li_no_spike_ref(x, tau, constrain_method="forward")
    assert out.shape == x.shape
    assert out.dtype == x.dtype
    assert jnp.allclose(out, ref, atol=1e-4, rtol=1e-4), "mismatch vs reference"

    print("KERNEL_OK")
</pallas_src>

<mosaic_0001>
module attributes {stable_mosaic.version = 11 : i64} {
  func.func @kernel(%arg0: i32, %arg1: i32, %arg2: memref<2x32x128xf32, #tpu.memory_space<vmem>>, %arg3: memref<32x16xf32, #tpu.memory_space<vmem>>, %arg4: memref<2x32x128xf32, #tpu.memory_space<vmem>>) attributes {dimension_semantics = [#tpu.dimension_semantics<parallel>, #tpu.dimension_semantics<parallel>], iteration_bounds = array<i64: 2, 1>, scalar_prefetch = 0 : i64, scratch_operands = 0 : i64, tpu.core_type = #tpu.core_type<tc>, window_params = [{transform_indices = @transform_0, window_bounds = array<i64: 2, 32, 128>}, {transform_indices = @transform_1, window_bounds = array<i64: 32, 16>}, {transform_indices = @transform_2, window_bounds = array<i64: 2, 32, 128>}]} {
    %c0 = arith.constant 0 : index
    %c0_0 = arith.constant 0 : index
    %c0_1 = arith.constant 0 : index
    %0 = vector.load %arg2[%c0, %c0_0, %c0_1] : memref<2x32x128xf32, #tpu.memory_space<vmem>>, vector<2x32x128xf32>
    %c0_2 = arith.constant 0 : index
    %c0_3 = arith.constant 0 : index
    %1 = vector.load %arg3[%c0_2, %c0_3] : memref<32x16xf32, #tpu.memory_space<vmem>>, vector<32x16xf32>
    %2 = tpu.iota {dimensions = array<i32: 2>} : vector<1x1x128xi32>
    %c8_i32 = arith.constant 8 : i32
    %3 = vector.broadcast %c8_i32 : i32 to vector<1x1x128xi32>
    %4 = arith.cmpi slt, %2, %3 : vector<1x1x128xi32>
    %5 = vector.extract_strided_slice %1 {offsets = [0, 0], sizes = [32, 1], strides = [1, 1]} : vector<32x16xf32> to vector<32x1xf32>
    %6 = vector.shape_cast %5 : vector<32x1xf32> to vector<1x32x1xf32>
    %cst = arith.constant 0.000000e+00 : f32
    %7 = vector.shape_cast %4 : vector<1x1x128xi1> to vector<1x1x128xi1>
    %8 = vector.broadcast %7 : vector<1x1x128xi1> to vector<1x32x128xi1>
    %9 = vector.shape_cast %6 : vector<1x32x1xf32> to vector<1x32x1xf32>
    %10 = vector.broadcast %9 : vector<1x32x1xf32> to vector<1x32x128xf32>
    %11 = vector.broadcast %cst : f32 to vector<1x32x128xf32>
    %12 = arith.select %8, %10, %11 : vector<1x32x128xi1>, vector<1x32x128xf32>
    %c8_i32_4 = arith.constant 8 : i32
    %13 = vector.broadcast %c8_i32_4 : i32 to vector<1x1x128xi32>
    %14 = arith.cmpi sge, %2, %13 : vector<1x1x128xi32>
    %c16_i32 = arith.constant 16 : i32
    %15 = vector.broadcast %c16_i32 : i32 to vector<1x1x128xi32>
    %16 = arith.cmpi slt, %2, %15 : vector<1x1x128xi32>
    %17 = arith.andi %14, %16 : vector<1x1x128xi1>
    %c8_i32_5 = arith.constant 8 : i32
    %18 = vector.broadcast %c8_i32_5 : i32 to vector<1x1x128xi32>
    %19 = arith.cmpi sge, %2, %18 : vector<1x1x128xi32>
    %c8_i32_6 = arith.constant 8 : i32
    %20 = vector.broadcast %c8_i32_6 : i32 to vector<1x1x128xi32>
    %21 = arith.subi %2, %20 : vector<1x1x128xi32>
    %22 = arith.select %19, %21, %2 : vector<1x1x128xi1>, vector<1x1x128xi32>
    %23 = vector.extract_strided_slice %1 {offsets = [0, 1], sizes = [32, 1], strides = [1, 1]} : vector<32x16xf32> to vector<32x1xf32>
    %24 = vector.shape_cast %23 : vector<32x1xf32> to vector<1x32x1xf32>
    %25 = vector.shape_cast %17 : vector<1x1x128xi1> to vector<1x1x128xi1>
    %26 = vector.broadcast %25 : vector<1x1x128xi1> to vector<1x32x128xi1>
    %27 = vector.shape_cast %24 : vector<1x32x1xf32> to vector<1x32x1xf32>
    %28 = vector.broadcast %27 : vector<1x32x1xf32> to vector<1x32x128xf32>
    %29 = arith.select %26, %28, %12 : vector<1x32x128xi1>, vector<1x32x128xf32>
    %c16_i32_7 = arith.constant 16 : i32
    %30 = vector.broadcast %c16_i32_7 : i32 to vector<1x1x128xi32>
    %31 = arith.cmpi sge, %2, %30 : vector<1x1x128xi32>
    %c24_i32 = arith.constant 24 : i32
    %32 = vector.broadcast %c24_i32 : i32 to vector<1x1x128xi32>
    %33 = arith.cmpi slt, %2, %32 : vector<1x1x128xi32>
    %34 = arith.andi %31, %33 : vector<1x1x128xi1>
    %c16_i32_8 = arith.constant 16 : i32
    %35 = vector.broadcast %c16_i32_8 : i32 to vector<1x1x128xi32>
    %36 = arith.cmpi sge, %2, %35 : vector<1x1x128xi32>
    %c16_i32_9 = arith.constant 16 : i32
    %37 = vector.broadcast %c16_i32_9 : i32 to vector<1x1x128xi32>
    %38 = arith.subi %2, %37 : vector<1x1x128xi32>
    %39 = arith.select %36, %38, %22 : vector<1x1x128xi1>, vector<1x1x128xi32>
    %40 = vector.extract_strided_slice %1 {offsets = [0, 2], sizes = [32, 1], strides = [1, 1]} : vector<32x16xf32> to vector<32x1xf32>
    %41 = vector.shape_cast %40 : vector<32x1xf32> to vector<1x32x1xf32>
    %42 = vector.shape_cast %34 : vector<1x1x128xi1> to vector<1x1x128xi1>
    %43 = vector.broadcast %42 : vector<1x1x128xi1> to vector<1x32x128xi1>
    %44 = vector.shape_cast %41 : vector<1x32x1xf32> to vector<1x32x1xf32>
    %45 = vector.broadcast %44 : vector<1x32x1xf32> to vector<1x32x128xf32>
    %46 = arith.select %43, %45, %29 : vector<1x32x128xi1>, vector<1x32x128xf32>
    %c24_i32_10 = arith.constant 24 : i32
    %47 = vector.broadcast %c24_i32_10 : i32 to vector<1x1x128xi32>
    %48 = arith.cmpi sge, %2, %47 : vector<1x1x128xi32>
    %c32_i32 = arith.constant 32 : i32
    %49 = vector.broadcast %c32_i32 : i32 to vector<1x1x128xi32>
    %50 = arith.cmpi slt, %2, %49 : vector<1x1x128xi32>
    %51 = arith.andi %48, %50 : vector<1x1x128xi1>
    %c24_i32_11 = arith.constant 24 : i32
    %52 = vector.broadcast %c24_i32_11 : i32 to vector<1x1x128xi32>
    %53 = arith.cmpi sge, %2, %52 : vector<1x1x128xi32>
    %c24_i32_12 = arith.constant 24 : i32
    %54 = vector.broadcast %c24_i32_12 : i32 to vector<1x1x128xi32>
    %55 = arith.subi %2, %54 : vector<1x1x128xi32>
    %56 = arith.select %53, %55, %39 : vector<1x1x128xi1>, vector<1x1x128xi32>
    %57 = vector.extract_strided_slice %1 {offsets = [0, 3], sizes = [32, 1], strides = [1, 1]} : vector<32x16xf32> to vector<32x1xf32>
    %58 = vector.shape_cast %57 : vector<32x1xf32> to vector<1x32x1xf32>
    %59 = vector.shape_cast %51 : vector<1x1x128xi1> to vector<1x1x128xi1>
    %60 = vector.broadcast %59 : vector<1x1x128xi1> to vector<1x32x128xi1>
    %61 = vector.shape_cast %58 : vector<1x32x1xf32> to vector<1x32x1xf32>
    %62 = vector.broadcast %61 : vector<1x32x1xf32> to vector<1x32x128xf32>
    %63 = arith.select %60, %62, %46 : vector<1x32x128xi1>, vector<1x32x128xf32>
    %c32_i32_13 = arith.constant 32 : i32
    %64 = vector.broadcast %c32_i32_13 : i32 to vector<1x1x128xi32>
    %65 = arith.cmpi sge, %2, %64 : vector<1x1x128xi32>
    %c40_i32 = arith.constant 40 : i32
    %66 = vector.broadcast %c40_i32 : i32 to vector<1x1x128xi32>
    %67 = arith.cmpi slt, %2, %66 : vector<1x1x128xi32>
    %68 = arith.andi %65, %67 : vector<1x1x128xi1>
    %c32_i32_14 = arith.constant 32 : i32
    %69 = vector.broadcast %c32_i32_14 : i32 to vector<1x1x128xi32>
    %70 = arith.cmpi sge, %2, %69 : vector<1x1x128xi32>
    %c32_i32_15 = arith.constant 32 : i32
    %71 = vector.broadcast %c32_i32_15 : i32 to vector<1x1x128xi32>
    %72 = arith.subi %2, %71 : vector<1x1x128xi32>
    %73 = arith.select %70, %72, %56 : vector<1x1x128xi1>, vector<1x1x128xi32>
    %74 = vector.extract_strided_slice %1 {offsets = [0, 4], sizes = [32, 1], strides = [1, 1]} : vector<32x16xf32> to vector<32x1xf32>
    %75 = vector.shape_cast %74 : vector<32x1xf32> to vector<1x32x1xf32>
    %76 = vector.shape_cast %68 : vector<1x1x128xi1> to vector<1x1x128xi1>
    %77 = vector.broadcast %76 : vector<1x1x128xi1> to vector<1x32x128xi1>
    %78 = vector.shape_cast %75 : vector<1x32x1xf32> to vector<1x32x1xf32>
    %79 = vector.broadcast %78 : vector<1x32x1xf32> to vector<1x32x128xf32>
    %80 = arith.select %77, %79, %63 : vector<1x32x128xi1>, vector<1x32x128xf32>
    %c40_i32_16 = arith.constant 40 : i32
    %81 = vector.broadcast %c40_i32_16 : i32 to vector<1x1x128xi32>
    %82 = arith.cmpi sge, %2, %81 : vector<1x1x128xi32>
    %c48_i32 = arith.constant 48 : i32
    %83 = vector.broadcast %c48_i32 : i32 to vector<1x1x128xi32>
    %84 = arith.cmpi slt, %2, %83 : vector<1x1x128xi32>
    %85 = arith.andi %82, %84 : vector<1x1x128xi1>
    %c40_i32_17 = arith.constant 40 : i32
    %86 = vector.broadcast %c40_i32_17 : i32 to vector<1x1x128xi32>
    %87 = arith.cmpi sge, %2, %86 : vector<1x1x128xi32>
    %c40_i32_18 = arith.constant 40 : i32
    %88 = vector.broadcast %c40_i32_18 : i32 to vector<1x1x128xi32>
    %89 = arith.subi %2, %88 : vector<1x1x128xi32>
    %90 = arith.select %87, %89, %73 : vector<1x1x128xi1>, vector<1x1x128xi32>
    %91 = vector.extract_strided_slice %1 {offsets = [0, 5], sizes = [32, 1], strides = [1, 1]} : vector<32x16xf32> to vector<32x1xf32>
    %92 = vector.shape_cast %91 : vector<32x1xf32> to vector<1x32x1xf32>
    %93 = vector.shape_cast %85 : vector<1x1x128xi1> to vector<1x1x128xi1>
    %94 = vector.broadcast %93 : vector<1x1x128xi1> to vector<1x32x128xi1>
    %95 = vector.shape_cast %92 : vector<1x32x1xf32> to vector<1x32x1xf32>
    %96 = vector.broadcast %95 : vector<1x32x1xf32> to vector<1x32x128xf32>
    %97 = arith.select %94, %96, %80 : vector<1x32x128xi1>, vector<1x32x128xf32>
    %c48_i32_19 = arith.constant 48 : i32
    %98 = vector.broadcast %c48_i32_19 : i32 to vector<1x1x128xi32>
    %99 = arith.cmpi sge, %2, %98 : vector<1x1x128xi32>
    %c56_i32 = arith.constant 56 : i32
    %100 = vector.broadcast %c56_i32 : i32 to vector<1x1x128xi32>
    %101 = arith.cmpi slt, %2, %100 : vector<1x1x128xi32>
    %102 = arith.andi %99, %101 : vector<1x1x128xi1>
    %c48_i32_20 = arith.constant 48 : i32
    %103 = vector.broadcast %c48_i32_20 : i32 to vector<1x1x128xi32>
    %104 = arith.cmpi sge, %2, %103 : vector<1x1x128xi32>
    %c48_i32_21 = arith.constant 48 : i32
    %105 = vector.broadcast %c48_i32_21 : i32 to vector<1x1x128xi32>
    %106 = arith.subi %2, %105 : vector<1x1x128xi32>
    %107 = arith.select %104, %106, %90 : vector<1x1x128xi1>, vector<1x1x128xi32>
    %108 = vector.extract_strided_slice %1 {offsets = [0, 6], sizes = [32, 1], strides = [1, 1]} : vector<32x16xf32> to vector<32x1xf32>
    %109 = vector.shape_cast %108 : vector<32x1xf32> to vector<1x32x1xf32>
    %110 = vector.shape_cast %102 : vector<1x1x128xi1> to vector<1x1x128xi1>
    %111 = vector.broadcast %110 : vector<1x1x128xi1> to vector<1x32x128xi1>
    %112 = vector.shape_cast %109 : vector<1x32x1xf32> to vector<1x32x1xf32>
    %113 = vector.broadcast %112 : vector<1x32x1xf32> to vector<1x32x128xf32>
    %114 = arith.select %111, %113, %97 : vector<1x32x128xi1>, vector<1x32x128xf32>
    %c56_i32_22 = arith.constant 56 : i32
    %115 = vector.broadcast %c56_i32_22 : i32 to vector<1x1x128xi32>
    %116 = arith.cmpi sge, %2, %115 : vector<1x1x128xi32>
    %c64_i32 = arith.constant 64 : i32
    %117 = vector.broadcast %c64_i32 : i32 to vector<1x1x128xi32>
    %118 = arith.cmpi slt, %2, %117 : vector<1x1x128xi32>
    %119 = arith.andi %116, %118 : vector<1x1x128xi1>
    %c56_i32_23 = arith.constant 56 : i32
    %120 = vector.broadcast %c56_i32_23 : i32 to vector<1x1x128xi32>
    %121 = arith.cmpi sge, %2, %120 : vector<1x1x128xi32>
    %c56_i32_24 = arith.constant 56 : i32
    %122 = vector.broadcast %c56_i32_24 : i32 to vector<1x1x128xi32>
    %123 = arith.subi %2, %122 : vector<1x1x128xi32>
    %124 = arith.select %121, %123, %107 : vector<1x1x128xi1>, vector<1x1x128xi32>
    %125 = vector.extract_strided_slice %1 {offsets = [0, 7], sizes = [32, 1], strides = [1, 1]} : vector<32x16xf32> to vector<32x1xf32>
    %126 = vector.shape_cast %125 : vector<32x1xf32> to vector<1x32x1xf32>
    %127 = vector.shape_cast %119 : vector<1x1x128xi1> to vector<1x1x128xi1>
    %128 = vector.broadcast %127 : vector<1x1x128xi1> to vector<1x32x128xi1>
    %129 = vector.shape_cast %126 : vector<1x32x1xf32> to vector<1x32x1xf32>
    %130 = vector.broadcast %129 : vector<1x32x1xf32> to vector<1x32x128xf32>
    %131 = arith.select %128, %130, %114 : vector<1x32x128xi1>, vector<1x32x128xf32>
    %c64_i32_25 = arith.constant 64 : i32
    %132 = vector.broadcast %c64_i32_25 : i32 to vector<1x1x128xi32>
    %133 = arith.cmpi sge, %2, %132 : vector<1x1x128xi32>
    %c72_i32 = arith.constant 72 : i32
    %134 = vector.broadcast %c72_i32 : i32 to vector<1x1x128xi32>
    %135 = arith.cmpi slt, %2, %134 : vector<1x1x128xi32>
    %136 = arith.andi %133, %135 : vector<1x1x128xi1>
    %c64_i32_26 = arith.constant 64 : i32
    %137 = vector.broadcast %c64_i32_26 : i32 to vector<1x1x128xi32>
    %138 = arith.cmpi sge, %2, %137 : vector<1x1x128xi32>
    %c64_i32_27 = arith.constant 64 : i32
    %139 = vector.broadcast %c64_i32_27 : i32 to vector<1x1x128xi32>
    %140 = arith.subi %2, %139 : vector<1x1x128xi32>
    %141 = arith.select %138, %140, %124 : vector<1x1x128xi1>, vector<1x1x128xi32>
    %142 = vector.extract_strided_slice %1 {offsets = [0, 8], sizes = [32, 1], strides = [1, 1]} : vector<32x16xf32> to vector<32x1xf32>
    %143 = vector.shape_cast %142 : vector<32x1xf32> to vector<1x32x1xf32>
    %144 = vector.shape_cast %136 : vector<1x1x128xi1> to vector<1x1x128xi1>
    %145 = vector.broadcast %144 : vector<1x1x128xi1> to vector<1x32x128xi1>
    %146 = vector.shape_cast %143 : vector<1x32x1xf32> to vector<1x32x1xf32>
    %147 = vector.broadcast %146 : vector<1x32x1xf32> to vector<1x32x128xf32>
    %148 = arith.select %145, %147, %131 : vector<1x32x128xi1>, vector<1x32x128xf32>
    %c72_i32_28 = arith.constant 72 : i32
    %149 = vector.broadcast %c72_i32_28 : i32 to vector<1x1x128xi32>
    %150 = arith.cmpi sge, %2, %149 : vector<1x1x128xi32>
    %c80_i32 = arith.constant 80 : i32
    %151 = vector.broadcast %c80_i32 : i32 to vector<1x1x128xi32>
    %152 = arith.cmpi slt, %2, %151 : vector<1x1x128xi32>
    %153 = arith.andi %150, %152 : vector<1x1x128xi1>
    %c72_i32_29 = arith.constant 72 : i32
    %154 = vector.broadcast %c72_i32_29 : i32 to vector<1x1x128xi32>
    %155 = arith.cmpi sge, %2, %154 : vector<1x1x128xi32>
    %c72_i32_30 = arith.constant 72 : i32
    %156 = vector.broadcast %c72_i32_30 : i32 to vector<1x1x128xi32>
    %157 = arith.subi %2, %156 : vector<1x1x128xi32>
    %158 = arith.select %155, %157, %141 : vector<1x1x128xi1>, vector<1x1x128xi32>
    %159 = vector.extract_strided_slice %1 {offsets = [0, 9], sizes = [32, 1], strides = [1, 1]} : vector<32x16xf32> to vector<32x1xf32>
    %160 = vector.shape_cast %159 : vector<32x1xf32> to vector<1x32x1xf32>
    %161 = vector.shape_cast %153 : vector<1x1x128xi1> to vector<1x1x128xi1>
    %162 = vector.broadcast %161 : vector<1x1x128xi1> to vector<1x32x128xi1>
    %163 = vector.shape_cast %160 : vector<1x32x1xf32> to vector<1x32x1xf32>
    %164 = vector.broadcast %163 : vector<1x32x1xf32> to vector<1x32x128xf32>
    %165 = arith.select %162, %164, %148 : vector<1x32x128xi1>, vector<1x32x128xf32>
    %c80_i32_31 = arith.constant 80 : i32
    %166 = vector.broadcast %c80_i32_31 : i32 to vector<1x1x128xi32>
    %167 = arith.cmpi sge, %2, %166 : vector<1x1x128xi32>
    %c88_i32 = arith.constant 88 : i32
    %168 = vector.broadcast %c88_i32 : i32 to vector<1x1x128xi32>
    %169 = arith.cmpi slt, %2, %168 : vector<1x1x128xi32>
    %170 = arith.andi %167, %169 : vector<1x1x128xi1>
    %c80_i32_32 = arith.constant 80 : i32
    %171 = vector.broadcast %c80_i32_32 : i32 to vector<1x1x128xi32>
    %172 = arith.cmpi sge, %2, %171 : vector<1x1x128xi32>
    %c80_i32_33 = arith.constant 80 : i32
    %173 = vector.broadcast %c80_i32_33 : i32 to vector<1x1x128xi32>
    %174 = arith.subi %2, %173 : vector<1x1x128xi32>
    %175 = arith.select %172, %174, %158 : vector<1x1x128xi1>, vector<1x1x128xi32>
    %176 = vector.extract_strided_slice %1 {offsets = [0, 10], sizes = [32, 1], strides = [1, 1]} : vector<32x16xf32> to vector<32x1xf32>
    %177 = vector.shape_cast %176 : vector<32x1xf32> to vector<1x32x1xf32>
    %178 = vector.shape_cast %170 : vector<1x1x128xi1> to vector<1x1x128xi1>
    %179 = vector.broadcast %178 : vector<1x1x128xi1> to vector<1x32x128xi1>
    %180 = vector.shape_cast %177 : vector<1x32x1xf32> to vector<1x32x1xf32>
    %181 = vector.broadcast %180 : vector<1x32x1xf32> to vector<1x32x128xf32>
    %182 = arith.select %179, %181, %165 : vector<1x32x128xi1>, vector<1x32x128xf32>
    %c88_i32_34 = arith.constant 88 : i32
    %183 = vector.broadcast %c88_i32_34 : i32 to vector<1x1x128xi32>
    %184 = arith.cmpi sge, %2, %183 : vector<1x1x128xi32>
    %c96_i32 = arith.constant 96 : i32
    %185 = vector.broadcast %c96_i32 : i32 to vector<1x1x128xi32>
    %186 = arith.cmpi slt, %2, %185 : vector<1x1x128xi32>
    %187 = arith.andi %184, %186 : vector<1x1x128xi1>
    %c88_i32_35 = arith.constant 88 : i32
    %188 = vector.broadcast %c88_i32_35 : i32 to vector<1x1x128xi32>
    %189 = arith.cmpi sge, %2, %188 : vector<1x1x128xi32>
    %c88_i32_36 = arith.constant 88 : i32
    %190 = vector.broadcast %c88_i32_36 : i32 to vector<1x1x128xi32>
    %191 = arith.subi %2, %190 : vector<1x1x128xi32>
    %192 = arith.select %189, %191, %175 : vector<1x1x128xi1>, vector<1x1x128xi32>
    %193 = vector.extract_strided_slice %1 {offsets = [0, 11], sizes = [32, 1], strides = [1, 1]} : vector<32x16xf32> to vector<32x1xf32>
    %194 = vector.shape_cast %193 : vector<32x1xf32> to vector<1x32x1xf32>
    %195 = vector.shape_cast %187 : vector<1x1x128xi1> to vector<1x1x128xi1>
    %196 = vector.broadcast %195 : vector<1x1x128xi1> to vector<1x32x128xi1>
    %197 = vector.shape_cast %194 : vector<1x32x1xf32> to vector<1x32x1xf32>
    %198 = vector.broadcast %197 : vector<1x32x1xf32> to vector<1x32x128xf32>
    %199 = arith.select %196, %198, %182 : vector<1x32x128xi1>, vector<1x32x128xf32>
    %c96_i32_37 = arith.constant 96 : i32
    %200 = vector.broadcast %c96_i32_37 : i32 to vector<1x1x128xi32>
    %201 = arith.cmpi sge, %2, %200 : vector<1x1x128xi32>
    %c104_i32 = arith.constant 104 : i32
    %202 = vector.broadcast %c104_i32 : i32 to vector<1x1x128xi32>
    %203 = arith.cmpi slt, %2, %202 : vector<1x1x128xi32>
    %204 = arith.andi %201, %203 : vector<1x1x128xi1>
    %c96_i32_38 = arith.constant 96 : i32
    %205 = vector.broadcast %c96_i32_38 : i32 to vector<1x1x128xi32>
    %206 = arith.cmpi sge, %2, %205 : vector<1x1x128xi32>
    %c96_i32_39 = arith.constant 96 : i32
    %207 = vector.broadcast %c96_i32_39 : i32 to vector<1x1x128xi32>
    %208 = arith.subi %2, %207 : vector<1x1x128xi32>
    %209 = arith.select %206, %208, %192 : vector<1x1x128xi1>, vector<1x1x128xi32>
    %210 = vector.extract_strided_slice %1 {offsets = [0, 12], sizes = [32, 1], strides = [1, 1]} : vector<32x16xf32> to vector<32x1xf32>
    %211 = vector.shape_cast %210 : vector<32x1xf32> to vector<1x32x1xf32>
    %212 = vector.shape_cast %204 : vector<1x1x128xi1> to vector<1x1x128xi1>
    %213 = vector.broadcast %212 : vector<1x1x128xi1> to vector<1x32x128xi1>
    %214 = vector.shape_cast %211 : vector<1x32x1xf32> to vector<1x32x1xf32>
    %215 = vector.broadcast %214 : vector<1x32x1xf32> to vector<1x32x128xf32>
    %216 = arith.select %213, %215, %199 : vector<1x32x128xi1>, vector<1x32x128xf32>
    %c104_i32_40 = arith.constant 104 : i32
    %217 = vector.broadcast %c104_i32_40 : i32 to vector<1x1x128xi32>
    %218 = arith.cmpi sge, %2, %217 : vector<1x1x128xi32>
    %c112_i32 = arith.constant 112 : i32
    %219 = vector.broadcast %c112_i32 : i32 to vector<1x1x128xi32>
    %220 = arith.cmpi slt, %2, %219 : vector<1x1x128xi32>
    %221 = arith.andi %218, %220 : vector<1x1x128xi1>
    %c104_i32_41 = arith.constant 104 : i32
    %222 = vector.broadcast %c104_i32_41 : i32 to vector<1x1x128xi32>
    %223 = arith.cmpi sge, %2, %222 : vector<1x1x128xi32>
    %c104_i32_42 = arith.constant 104 : i32
    %224 = vector.broadcast %c104_i32_42 : i32 to vector<1x1x128xi32>
    %225 = arith.subi %2, %224 : vector<1x1x128xi32>
    %226 = arith.select %223, %225, %209 : vector<1x1x128xi1>, vector<1x1x128xi32>
    %227 = vector.extract_strided_slice %1 {offsets = [0, 13], sizes = [32, 1], strides = [1, 1]} : vector<32x16xf32> to vector<32x1xf32>
    %228 = vector.shape_cast %227 : vector<32x1xf32> to vector<1x32x1xf32>
    %229 = vector.shape_cast %221 : vector<1x1x128xi1> to vector<1x1x128xi1>
    %230 = vector.broadcast %229 : vector<1x1x128xi1> to vector<1x32x128xi1>
    %231 = vector.shape_cast %228 : vector<1x32x1xf32> to vector<1x32x1xf32>
    %232 = vector.broadcast %231 : vector<1x32x1xf32> to vector<1x32x128xf32>
    %233 = arith.select %230, %232, %216 : vector<1x32x128xi1>, vector<1x32x128xf32>
    %c112_i32_43 = arith.constant 112 : i32
    %234 = vector.broadcast %c112_i32_43 : i32 to vector<1x1x128xi32>
    %235 = arith.cmpi sge, %2, %234 : vector<1x1x128xi32>
    %c120_i32 = arith.constant 120 : i32
    %236 = vector.broadcast %c120_i32 : i32 to vector<1x1x128xi32>
    %237 = arith.cmpi slt, %2, %236 : vector<1x1x128xi32>
    %238 = arith.andi %235, %237 : vector<1x1x128xi1>
    %c112_i32_44 = arith.constant 112 : i32
    %239 = vector.broadcast %c112_i32_44 : i32 to vector<1x1x128xi32>
    %240 = arith.cmpi sge, %2, %239 : vector<1x1x128xi32>
    %c112_i32_45 = arith.constant 112 : i32
    %241 = vector.broadcast %c112_i32_45 : i32 to vector<1x1x128xi32>
    %242 = arith.subi %2, %241 : vector<1x1x128xi32>
    %243 = arith.select %240, %242, %226 : vector<1x1x128xi1>, vector<1x1x128xi32>
    %244 = vector.extract_strided_slice %1 {offsets = [0, 14], sizes = [32, 1], strides = [1, 1]} : vector<32x16xf32> to vector<32x1xf32>
    %245 = vector.shape_cast %244 : vector<32x1xf32> to vector<1x32x1xf32>
    %246 = vector.shape_cast %238 : vector<1x1x128xi1> to vector<1x1x128xi1>
    %247 = vector.broadcast %246 : vector<1x1x128xi1> to vector<1x32x128xi1>
    %248 = vector.shape_cast %245 : vector<1x32x1xf32> to vector<1x32x1xf32>
    %249 = vector.broadcast %248 : vector<1x32x1xf32> to vector<1x32x128xf32>
    %250 = arith.select %247, %249, %233 : vector<1x32x128xi1>, vector<1x32x128xf32>
    %c120_i32_46 = arith.constant 120 : i32
    %251 = vector.broadcast %c120_i32_46 : i32 to vector<1x1x128xi32>
    %252 = arith.cmpi sge, %2, %251 : vector<1x1x128xi32>
    %c128_i32 = arith.constant 128 : i32
    %253 = vector.broadcast %c128_i32 : i32 to vector<1x1x128xi32>
    %254 = arith.cmpi slt, %2, %253 : vector<1x1x128xi32>
    %255 = arith.andi %252, %254 : vector<1x1x128xi1>
    %c120_i32_47 = arith.constant 120 : i32
    %256 = vector.broadcast %c120_i32_47 : i32 to vector<1x1x128xi32>
    %257 = arith.cmpi sge, %2, %256 : vector<1x1x128xi32>
    %c120_i32_48 = arith.constant 120 : i32
    %258 = vector.broadcast %c120_i32_48 : i32 to vector<1x1x128xi32>
    %259 = arith.subi %2, %258 : vector<1x1x128xi32>
    %260 = arith.select %257, %259, %243 : vector<1x1x128xi1>, vector<1x1x128xi32>
    %261 = vector.extract_strided_slice %1 {offsets = [0, 15], sizes = [32, 1], strides = [1, 1]} : vector<32x16xf32> to vector<32x1xf32>
    %262 = vector.shape_cast %261 : vector<32x1xf32> to vector<1x32x1xf32>
    %263 = vector.shape_cast %255 : vector<1x1x128xi1> to vector<1x1x128xi1>
    %264 = vector.broadcast %263 : vector<1x1x128xi1> to vector<1x32x128xi1>
    %265 = vector.shape_cast %262 : vector<1x32x1xf32> to vector<1x32x1xf32>
    %266 = vector.broadcast %265 : vector<1x32x1xf32> to vector<1x32x128xf32>
    %267 = arith.select %264, %266, %250 : vector<1x32x128xi1>, vector<1x32x128xf32>
    %c1_i32 = arith.constant 1 : i32
    %268 = vector.broadcast %c1_i32 : i32 to vector<1x1x128xi32>
    %269 = arith.cmpi sge, %260, %268 : vector<1x1x128xi32>
    %cst_49 = arith.constant 0.000000e+00 : f32
    %270 = vector.shape_cast %269 : vector<1x1x128xi1> to vector<1x1x128xi1>
    %271 = vector.broadcast %270 : vector<1x1x128xi1> to vector<1x32x128xi1>
    %272 = vector.broadcast %cst_49 : f32 to vector<1x32x128xf32>
    %273 = arith.select %271, %267, %272 : vector<1x32x128xi1>, vector<1x32x128xf32>
    %c1_i32_50 = arith.constant 1 : i32
    %274 = tpu.dynamic_rotate %0 by %c1_i32_50 dim 2 : vector<2x32x128xf32>, i32 -> vector<2x32x128xf32>
    %275 = vector.broadcast %273 : vector<1x32x128xf32> to vector<2x32x128xf32>
    %276 = arith.mulf %275, %274 : vector<2x32x128xf32>
    %277 = arith.addf %0, %276 : vector<2x32x128xf32>
    %278 = arith.mulf %267, %267 : vector<1x32x128xf32>
    %c2_i32 = arith.constant 2 : i32
    %279 = vector.broadcast %c2_i32 : i32 to vector<1x1x128xi32>
    %280 = arith.cmpi sge, %260, %279 : vector<1x1x128xi32>
    %cst_51 = arith.constant 0.000000e+00 : f32
    %281 = vector.shape_cast %280 : vector<1x1x128xi1> to vector<1x1x128xi1>
    %282 = vector.broadcast %281 : vector<1x1x128xi1> to vector<1x32x128xi1>
    %283 = vector.broadcast %cst_51 : f32 to vector<1x32x128xf32>
    %284 = arith.select %282, %278, %283 : vector<1x32x128xi1>, vector<1x32x128xf32>
    %c2_i32_52 = arith.constant 2 : i32
    %285 = tpu.dynamic_rotate %277 by %c2_i32_52 dim 2 : vector<2x32x128xf32>, i32 -> vector<2x32x128xf32>
    %286 = vector.broadcast %284 : vector<1x32x128xf32> to vector<2x32x128xf32>
    %287 = arith.mulf %286, %285 : vector<2x32x128xf32>
    %288 = arith.addf %277, %287 : vector<2x32x128xf32>
    %289 = arith.mulf %278, %278 : vector<1x32x128xf32>
    %c4_i32 = arith.constant 4 : i32
    %290 = vector.broadcast %c4_i32 : i32 to vector<1x1x128xi32>
    %291 = arith.cmpi sge, %260, %290 : vector<1x1x128xi32>
    %cst_53 = arith.constant 0.000000e+00 : f32
    %292 = vector.shape_cast %291 : vector<1x1x128xi1> to vector<1x1x128xi1>
    %293 = vector.broadcast %292 : vector<1x1x128xi1> to vector<1x32x128xi1>
    %294 = vector.broadcast %cst_53 : f32 to vector<1x32x128xf32>
    %295 = arith.select %293, %289, %294 : vector<1x32x128xi1>, vector<1x32x128xf32>
    %c4_i32_54 = arith.constant 4 : i32
    %296 = tpu.dynamic_rotate %288 by %c4_i32_54 dim 2 : vector<2x32x128xf32>, i32 -> vector<2x32x128xf32>
    %297 = vector.broadcast %295 : vector<1x32x128xf32> to vector<2x32x128xf32>
    %298 = arith.mulf %297, %296 : vector<2x32x128xf32>
    %299 = arith.addf %288, %298 : vector<2x32x128xf32>
    %c0_55 = arith.constant 0 : index
    %c0_56 = arith.constant 0 : index
    %c0_57 = arith.constant 0 : index
    %300 = vector.load %arg4[%c0_55, %c0_56, %c0_57] : memref<2x32x128xf32, #tpu.memory_space<vmem>>, vector<2x32x128xf32>
    tpu.vector_store %arg4[%c0_55, %c0_56, %c0_57], %299 {strides = array<i32>} : memref<2x32x128xf32, #tpu.memory_space<vmem>>, vector<2x32x128xf32>,
    return
  }
  func.func @transform_0(%arg0: i32, %arg1: i32) -> (i32, i32, i32) {
    %c0_i32 = arith.constant 0 : i32
    %c0_i32_0 = arith.constant 0 : i32
    return %arg1, %arg0, %c0_i32 : i32, i32, i32
  }
  func.func @transform_1(%arg0: i32, %arg1: i32) -> (i32, i32) {
    %c0_i32 = arith.constant 0 : i32
    %c0_i32_0 = arith.constant 0 : i32
    return %arg0, %c0_i32 : i32, i32
  }
  func.func @transform_2(%arg0: i32, %arg1: i32) -> (i32, i32, i32) {
    %c0_i32 = arith.constant 0 : i32
    %c0_i32_0 = arith.constant 0 : i32
    return %arg1, %arg0, %c0_i32 : i32, i32, i32
  }
}

</mosaic_0001>

<llo_original>
// kernel: tpu_custom_call.1
$region0: #{tpu_custom_call.1}
  #allocation0 [shape = 'u32[]', space=smem, size = 0x4, offset = 0x4, fixed_abs, tag = 'smem constant byte address 0x4 - core index']
  #allocation1 [shape = 'u32[144,128]{1,0:T(1,128)}', space=vmem, size = 0x12000, scoped, tag = 'internal scratch']
  #allocation6 [shape = 's32[]', space=sflag, size = 0x4, offset = 0, fixed_abs, tag = 'sflag constant byte address 0x0 - dummy sync flag']
  #allocation8 [shape = 's32[]', space=sflag, size = 0x4, offset = 0, fixed_abs, tag = 'sflag constant byte address 0x0 - dummy sync flag']
  %s0 = inlined_call_operand.hbm [shape: f32[2,64,128], index: 0, kind: input, shape index: {}]
  %s1 = inlined_call_operand.vmem [shape: f32[64,16], index: 1, kind: input, shape index: {}]
  %s2 = inlined_call_operand.hbm [shape: f32[2,64,128], index: 2, kind: output, shape index: {}]
  %s3 = sld [smem:[#allocation0]]
  $region45: #{tpu_custom_call.1} parent=0
    _
  %s5 = ssub.s32 1, %s3
  %s6 = scalar_select 0, %s5, %s3
  $region1: #{tpu_custom_call.1} parent=0
    #allocation2 [shape = 'u8[65536]{0}', space=vmem, size = 0x10000, scoped, tag = 'input window, operand 0']
    #allocation3 [shape = 's32[2]{0}', space=sflag, size = 0x8, scoped, tag = 'scoped memory for tpu_custom_call.1']
    #allocation4 [shape = 's32[2]{0}', space=sflag, size = 0x8, scoped, tag = 'scoped memory for tpu_custom_call.1']
    #allocation5 [shape = 'u8[65536]{0}', space=vmem, size = 0x10000, scoped, tag = 'output window, operand 0']
    %7 = vsyncpa [#allocation3], 0
    %s8 = scalar_lea.sflag [#allocation3], 1
    %9 = vsyncpa %s8, 0
    %10 = vsyncpa [#allocation4], 0
    %s11 = scalar_lea.sflag [#allocation4], 1
    %12 = vsyncpa %s11, 0
    loop: start=0, step=1, limit=4
    $region2: #{tpu_custom_call.1} parent=1 // loop_pre_header
      _
    $region3: #{tpu_custom_call.1} parent=1 // loop_header
      %s14 = sphi 0, %s18
      %p15 = scmp.ge.s32.totalorder %s14, 4
      %s21 = sphi 0, %s33
      %s22 = sphi 0, %s29
      %s23 = sphi 0, %s21
      %s24 = sphi 0, %s22
      %s25 = sphi 0, %s23
      %s26 = sphi 0, %s24
      %s38 = sphi 0, %s40
      %s41 = sphi 0, %s38
      %s42 = sphi 0, %s41
      %s58 = sphi 0, %s42
      %s64 = sphi 0, %s66
      %s67 = sphi 0, %s64
      %s68 = sphi 0, %s67
      %s84 = sphi 0, %s68
      %s92 = sphi 0, %s94
      %s95 = sphi 0, %s92
      %s96 = sphi 0, %s95
      %s112 = sphi 0, %s96
    $region4: #{tpu_custom_call.1} parent=1 // loop_header_branch
      %17 = sbr.rel (%p15) target = $region8
    $region5: #{tpu_custom_call.1} parent=1 // loop_body
      %s19 = ssub.s32 %s14, 1
      %s20 = ssub.s32 %s14, 2
      %s27 = sadd.s32 1, %s22
      %p28 = scmp.ge.s32.totalorder %s27, 1
      %s29 = scalar_select %p28, 0, %s27
      %s30 = sadd.s32 1, %s21
      %s31 = scalar_select %p28, %s30, %s21
      %p32 = scmp.ge.s32.totalorder %s31, 2
      %s33 = scalar_select %p32, 0, %s31
      %s34 = ssub.s32 %s22, %s29
      %s35 = ssub.s32 %s21, %s33
      %s36 = sor.u32 %s34, %s35
      %p37 = scmp.eq.s32.totalorder %s36, 0
      %s39 = sadd.s32 %s38, 1
      %s40 = scalar_select %p37, %s38, %s39
      %p43 = pneg %p37
      %p44 = scmp.eq.s32.totalorder %s14, 1
      %p45 = por %p43, %p44
      %p46 = scmp.ne.s32.totalorder %s38, %s41
      %p47 = scmp.eq.s32.totalorder %s14, 0
      %p48 = por %p46, %p47
      %p49 = scmp.ne.s32.totalorder %s38, %s41
      %p50 = scmp.eq.s32.totalorder %s19, 1
      %p51 = por %p49, %p50
      %p52 = scmp.ne.s32.totalorder %s41, %s42
      %p53 = scmp.eq.s32.totalorder %s19, 0
      %p54 = por %p52, %p53
      %p55 = scmp.ne.s32.totalorder %s41, %s42
      %p56 = scmp.eq.s32.totalorder %s20, 1
      %p57 = por %p55, %p56
      %p59 = scmp.ne.s32.totalorder %s42, %s58
      %p60 = scmp.eq.s32.totalorder %s20, 0
      %p61 = por %p59, %p60
      %s62 = ssub.s32 %s21, %s33
      %p63 = scmp.eq.s32.totalorder %s62, 0
      %s65 = sadd.s32 %s64, 1
      %s66 = scalar_select %p63, %s64, %s65
      %p69 = pneg %p63
      %p70 = scmp.eq.s32.totalorder %s14, 1
      %p71 = por %p69, %p70
      %p72 = scmp.ne.s32.totalorder %s64, %s67
      %p73 = scmp.eq.s32.totalorder %s14, 0
      %p74 = por %p72, %p73
      %p75 = scmp.ne.s32.totalorder %s64, %s67
      %p76 = scmp.eq.s32.totalorder %s19, 1
      %p77 = por %p75, %p76
      %p78 = scmp.ne.s32.totalorder %s67, %s68
      %p79 = scmp.eq.s32.totalorder %s19, 0
      %p80 = por %p78, %p79
      %p81 = scmp.ne.s32.totalorder %s67, %s68
      %p82 = scmp.eq.s32.totalorder %s20, 1
      %p83 = por %p81, %p82
      %p85 = scmp.ne.s32.totalorder %s68, %s84
      %p86 = scmp.eq.s32.totalorder %s20, 0
      %p87 = por %p85, %p86
      %s88 = ssub.s32 %s22, %s29
      %s89 = ssub.s32 %s21, %s33
      %s90 = sor.u32 %s88, %s89
      %p91 = scmp.eq.s32.totalorder %s90, 0
      %s93 = sadd.s32 %s92, 1
      %s94 = scalar_select %p91, %s92, %s93
      %p97 = pneg %p91
      %p98 = scmp.eq.s32.totalorder %s14, 1
      %p99 = por %p97, %p98
      %p100 = scmp.ne.s32.totalorder %s92, %s95
      %p101 = scmp.eq.s32.totalorder %s14, 0
      %p102 = por %p100, %p101
      %p103 = scmp.ne.s32.totalorder %s92, %s95
      %p104 = scmp.eq.s32.totalorder %s19, 1
      %p105 = por %p103, %p104
      %p106 = scmp.ne.s32.totalorder %s95, %s96
      %p107 = scmp.eq.s32.totalorder %s19, 0
      %p108 = por %p106, %p107
      %p109 = scmp.ne.s32.totalorder %s95, %s96
      %p110 = scmp.eq.s32.totalorder %s20, 1
      %p111 = por %p109, %p110
      %p113 = scmp.ne.s32.totalorder %s96, %s112
      %p114 = scmp.eq.s32.totalorder %s20, 0
      %p115 = por %p113, %p114
      %p116 = scmp.le.s32.totalorder 1, %s14
      %p117 = scmp.lt.s32.totalorder %s14, 3
      %p118 = pnand %p116, %p117
      %p119 = pneg %p118
      // Predicated region
      $region9: #{tpu_custom_call.1} parent=5 // pred_check
        _
      $region10: #{tpu_custom_call.1} parent=5 // pred_check_branch
        %121 = sbr.rel (%p118) target = $region12
      $region11: #{tpu_custom_call.1} parent=5 // pred_region
        %s122 = ssub.s32 %s14, 1
      $region12: #{tpu_custom_call.1} parent=5 // pred_fallthru
        _
      %p123 = scmp.lt.s32.totalorder %s14, 2
      // Predicated region
      $region13: #{tpu_custom_call.1} parent=5 // pred_check
        %p124 = pneg %p123
      $region14: #{tpu_custom_call.1} parent=5 // pred_check_branch
        %126 = sbr.rel (%p124) target = $region16
      $region15: #{tpu_custom_call.1} parent=5 // pred_region
        // Predicated region
        $region17: #{tpu_custom_call.1} parent=15 // pred_check
          %p127 = pneg %p48
        $region18: #{tpu_custom_call.1} parent=15 // pred_check_branch
          %129 = sbr.rel (%p127) target = $region20
        $region19: #{tpu_custom_call.1} parent=15 // pred_region
          #allocation7 [shape = 'u32[6]{0}', space=smem, size = 0x18, scoped, tag = 'DMA stride descriptor']
          %s130 = sand.u32 %s38, 1
          %s131 = scalar_lea.sflag [#allocation3], %s130
          %s132 = sand.u32 %s38, 1
          %s133 = smul.addr %s132, 64
          %s134 = scalar_lea.vmem [#allocation2], %s133
          %s135 = smul.u32 2, %s22
          %s136 = smul.u32 4, %s21
          %s138 = ssub.s32 1024, 1024
          %139 = vsyncadd %s131, %s138
          %s140 = smul.addr %s135, 8
          %s141 = sadd.s32 %s136, %s140
          %s142 = smul.addr %s141, 128
          %s143 = scalar_lea.hbm %s0, %s142
          %s145 = sshll.u32 1, 14
          %s146 = sxor.u32 4294967295, %s145
          %s148 = sld [smem:[#allocation0]]
          %s149 = sadd.s32 2, %s148
          %s151 = sshll.u32 7, 26
          %s152 = sxor.u32 4294967295, %s151
          %s153 = sand.u32 0, %s152
          %s154 = sshll.u32 %s149, 26
          %s155 = sor.u32 %s153, %s154
          %s156 = sshll.u32 %s134, 4
          %s157 = int_to_ptr.vmem [resolvable:$true] %s156
          %163 = sst [smem:[#allocation7]] 1024
          %s164 = scalar_lea.smem [#allocation7], 1
          %165 = sst [smem:[%s164]] 512
          %s166 = scalar_lea.smem [#allocation7], 2
          %167 = sst [smem:[%s166]] 4
          %s168 = scalar_lea.smem [#allocation7], 3
          %169 = sst [smem:[%s168]] 128
          %s170 = scalar_lea.smem [#allocation7], 4
          %171 = sst [smem:[%s170]] 128
          %s172 = scalar_lea.smem [#allocation7], 5
          %173 = sst [smem:[%s172]] 8
          %175 = dma.general %s143, 1024, %s157, %s131, [#allocation6], [#allocation7], %s155, 0
        $region20: #{tpu_custom_call.1} parent=15 // pred_fallthru
          _
        // Predicated region
        $region21: #{tpu_custom_call.1} parent=15 // pred_check
          %p176 = pneg %p74
        $region22: #{tpu_custom_call.1} parent=15 // pred_check_branch
          %178 = sbr.rel (%p176) target = $region24
        $region23: #{tpu_custom_call.1} parent=15 // pred_region
          %s179 = smul.u32 4, %s21
          %p180 = scmp.lt.s32.totalorder %s179, 7
          %s181 = scalar_select %p180, %s179, 7
          %s182 = smul.addr %s181, 8
          %s183 = scalar_lea.vmem %s1, %s182
          %s184 = smul.u32 4, %s21
        $region24: #{tpu_custom_call.1} parent=15 // pred_fallthru
          _
      $region16: #{tpu_custom_call.1} parent=5 // pred_fallthru
        _
      %p185 = scmp.le.s32.totalorder 1, %s14
      %p186 = scmp.lt.s32.totalorder %s14, 3
      %p187 = pnand %p185, %p186
      %p188 = pneg %p187
      // Predicated region
      $region25: #{tpu_custom_call.1} parent=5 // pred_check
        _
      $region26: #{tpu_custom_call.1} parent=5 // pred_check_branch
        %190 = sbr.rel (%p187) target = $region28
      $region27: #{tpu_custom_call.1} parent=5 // pred_region
        %s191 = ssub.s32 %s14, 1
        %s192 = sand.u32 %s41, 1
        %s193 = scalar_lea.sflag [#allocation3], %s192
        %s194 = sand.u32 %s41, 1
        %s195 = smul.addr %s194, 64
        %s196 = scalar_lea.vmem [#allocation2], %s195
        // Predicated region
        $region29: #{tpu_custom_call.1} parent=27 // pred_check
          %p197 = pneg %p54
        $region30: #{tpu_custom_call.1} parent=27 // pred_check_branch
          %199 = sbr.rel (%p197) target = $region32
        $region31: #{tpu_custom_call.1} parent=27 // pred_region
          %200 = dma.done %s193, 1024
        $region32: #{tpu_custom_call.1} parent=27 // pred_fallthru
          _
        %s201 = sand.u32 %s41, 1
        %s202 = scalar_lea.sflag [#allocation3], %s201
        %s203 = sand.u32 %s41, 1
        %s204 = smul.addr %s203, 64
        %s205 = scalar_lea.vmem [#allocation2], %s204
        %p206 = pneg %p54
        %p207 = pneg %p51
        %s208 = smul.u32 4, %s23
        %p209 = scmp.lt.s32.totalorder %s208, 7
        %s210 = scalar_select %p209, %s208, 7
        %s211 = smul.addr %s210, 8
        %s212 = scalar_lea.vmem %s1, %s211
        %p213 = pneg %p80
        %p214 = pneg %p77
        %p215 = pneg %p108
        %p216 = pneg %p105
        %s217 = sand.u32 %s95, 1
        %s218 = scalar_lea.sflag [#allocation4], %s217
        %s219 = sand.u32 %s95, 1
        %s220 = smul.addr %s219, 64
        %s221 = scalar_lea.vmem [#allocation5], %s220
        %s222 = smul.u32 2, %s24
        %s223 = smul.u32 4, %s23
        %s224 = smul.u32 4, %s23
        %p225 = scmp.lt.s32.totalorder %s224, 7
        %s226 = scalar_select %p225, %s224, 7
        %s227 = smul.addr %s226, 8
        %s228 = scalar_lea.vmem %s1, %s227
        %s229 = smul.u32 4, %s23
        %s230 = smul.u32 2, %s24
        %s231 = smul.u32 4, %s23
        %v232 = vld [vmem:[%s196] sm:$0xff]
        %v233 = vld [vmem:[%s196 + $0x8] sm:$0xff]
        %v234 = vld [vmem:[%s196 + $0x10] sm:$0xff]
        %v235 = vld [vmem:[%s196 + $0x18] sm:$0xff]
        %v236 = vld [vmem:[%s196 + $0x20] sm:$0xff]
        %v237 = vld [vmem:[%s196 + $0x28] sm:$0xff]
        %v238 = vld [vmem:[%s196 + $0x30] sm:$0xff]
        %v239 = vld [vmem:[%s196 + $0x38] sm:$0xff]
        %v240 = vld [vmem:[%s228] sm:$0xff]
        %v241 = vld [vmem:[%s228 + $0x8] sm:$0xff]
        %v242 = vld [vmem:[%s228 + $0x10] sm:$0xff]
        %v243 = vld [vmem:[%s228 + $0x18] sm:$0xff]
        %v244 = vlaneseq
        %v245 = vand.u32 %v244, 127
        %vm246 = vcmp.lt.s32.totalorder %v245, 8
        %v247 = vsel %vm246, 1, 0
        %vm248 = vcmp.eq.s32.totalorder %v247, 1
        %250 = vset.pattern.permute.xlu0 0
        %251 = vperm.xlu0 %250, %v240
        %v252 = vpop.permute.xlu0 %251
        %255 = vset.pattern.permute.xlu0 0
        %256 = vperm.xlu0 %255, %v241
        %v257 = vpop.permute.xlu0 %256
        %260 = vset.pattern.permute.xlu0 0
        %261 = vperm.xlu0 %260, %v242
        %v262 = vpop.permute.xlu0 %261
        %265 = vset.pattern.permute.xlu0 0
        %266 = vperm.xlu0 %265, %v243
        %v267 = vpop.permute.xlu0 %266
        %v269 = vsel %vm248, %v252, 0.0
        %v270 = vsel %vm248, %v257, 0.0
        %v271 = vsel %vm248, %v262, 0.0
        %v272 = vsel %vm248, %v267, 0.0
        %vm273 = vcmp.ge.s32.totalorder %v245, 8
        %vm274 = vcmp.lt.s32.totalorder %v245, 16
        %vm275 = vmand %vm273, %vm274
        %v276 = vsub.s32 %v245, 8
        %v277 = vsel %vm273, %v276, %v245
        %v278 = vsel %vm275, 1, 0
        %vm279 = vcmp.eq.s32.totalorder %v278, 1
        %280 = vset.pattern.permute.xlu0 1
        %281 = vperm.xlu0 %280, %v240
        %v282 = vpop.permute.xlu0 %281
        %284 = vset.pattern.permute.xlu0 1
        %285 = vperm.xlu0 %284, %v241
        %v286 = vpop.permute.xlu0 %285
        %288 = vset.pattern.permute.xlu0 1
        %289 = vperm.xlu0 %288, %v242
        %v290 = vpop.permute.xlu0 %289
        %292 = vset.pattern.permute.xlu0 1
        %293 = vperm.xlu0 %292, %v243
        %v294 = vpop.permute.xlu0 %293
        %v296 = vsel %vm279, %v282, %v269
        %v297 = vsel %vm279, %v286, %v270
        %v298 = vsel %vm279, %v290, %v271
        %v299 = vsel %vm279, %v294, %v272
        %vm300 = vcmp.ge.s32.totalorder %v245, 16
        %vm301 = vcmp.lt.s32.totalorder %v245, 24
        %vm302 = vmand %vm300, %vm301
        %v303 = vsub.s32 %v245, 16
        %v304 = vsel %vm300, %v303, %v277
        %v305 = vsel %vm302, 1, 0
        %vm306 = vcmp.eq.s32.totalorder %v305, 1
        %307 = vset.pattern.permute.xlu0 2
        %308 = vperm.xlu0 %307, %v240
        %v309 = vpop.permute.xlu0 %308
        %311 = vset.pattern.permute.xlu0 2
        %312 = vperm.xlu0 %311, %v241
        %v313 = vpop.permute.xlu0 %312
        %315 = vset.pattern.permute.xlu0 2
        %316 = vperm.xlu0 %315, %v242
        %v317 = vpop.permute.xlu0 %316
        %319 = vset.pattern.permute.xlu0 2
        %320 = vperm.xlu0 %319, %v243
        %v321 = vpop.permute.xlu0 %320
        %v323 = vsel %vm306, %v309, %v296
        %v324 = vsel %vm306, %v313, %v297
        %v325 = vsel %vm306, %v317, %v298
        %v326 = vsel %vm306, %v321, %v299
        %vm327 = vcmp.ge.s32.totalorder %v245, 24
        %vm328 = vcmp.lt.s32.totalorder %v245, 32
        %vm329 = vmand %vm327, %vm328
        %v330 = vsub.s32 %v245, 24
        %v331 = vsel %vm327, %v330, %v304
        %v332 = vsel %vm329, 1, 0
        %vm333 = vcmp.eq.s32.totalorder %v332, 1
        %334 = vset.pattern.permute.xlu0 3
        %335 = vperm.xlu0 %334, %v240
        %v336 = vpop.permute.xlu0 %335
        %338 = vset.pattern.permute.xlu0 3
        %339 = vperm.xlu0 %338, %v241
        %v340 = vpop.permute.xlu0 %339
        %342 = vset.pattern.permute.xlu0 3
        %343 = vperm.xlu0 %342, %v242
        %v344 = vpop.permute.xlu0 %343
        %346 = vset.pattern.permute.xlu0 3
        %347 = vperm.xlu0 %346, %v243
        %v348 = vpop.permute.xlu0 %347
        %v350 = vsel %vm333, %v336, %v323
        %v351 = vsel %vm333, %v340, %v324
        %v352 = vsel %vm333, %v344, %v325
        %v353 = vsel %vm333, %v348, %v326
        %vm354 = vcmp.ge.s32.totalorder %v245, 32
        %vm355 = vcmp.lt.s32.totalorder %v245, 40
        %vm356 = vmand %vm354, %vm355
        %v357 = vsub.s32 %v245, 32
        %v358 = vsel %vm354, %v357, %v331
        %v359 = vsel %vm356, 1, 0
        %vm360 = vcmp.eq.s32.totalorder %v359, 1
        %361 = vset.pattern.permute.xlu0 4
        %362 = vperm.xlu0 %361, %v240
        %v363 = vpop.permute.xlu0 %362
        %365 = vset.pattern.permute.xlu0 4
        %366 = vperm.xlu0 %365, %v241
        %v367 = vpop.permute.xlu0 %366
        %369 = vset.pattern.permute.xlu0 4
        %370 = vperm.xlu0 %369, %v242
        %v371 = vpop.permute.xlu0 %370
        %373 = vset.pattern.permute.xlu0 4
        %374 = vperm.xlu0 %373, %v243
        %v375 = vpop.permute.xlu0 %374
        %v377 = vsel %vm360, %v363, %v350
        %v378 = vsel %vm360, %v367, %v351
        %v379 = vsel %vm360, %v371, %v352
        %v380 = vsel %vm360, %v375, %v353
        %vm381 = vcmp.ge.s32.totalorder %v245, 40
        %vm382 = vcmp.lt.s32.totalorder %v245, 48
        %vm383 = vmand %vm381, %vm382
        %v384 = vsub.s32 %v245, 40
        %v385 = vsel %vm381, %v384, %v358
        %v386 = vsel %vm383, 1, 0
        %vm387 = vcmp.eq.s32.totalorder %v386, 1
        %388 = vset.pattern.permute.xlu0 5
        %389 = vperm.xlu0 %388, %v240
        %v390 = vpop.permute.xlu0 %389
        %392 = vset.pattern.permute.xlu0 5
        %393 = vperm.xlu0 %392, %v241
        %v394 = vpop.permute.xlu0 %393
        %396 = vset.pattern.permute.xlu0 5
        %397 = vperm.xlu0 %396, %v242
        %v398 = vpop.permute.xlu0 %397
        %400 = vset.pattern.permute.xlu0 5
        %401 = vperm.xlu0 %400, %v243
        %v402 = vpop.permute.xlu0 %401
        %v404 = vsel %vm387, %v390, %v377
        %v405 = vsel %vm387, %v394, %v378
        %v406 = vsel %vm387, %v398, %v379
        %v407 = vsel %vm387, %v402, %v380
        %vm408 = vcmp.ge.s32.totalorder %v245, 48
        %vm409 = vcmp.lt.s32.totalorder %v245, 56
        %vm410 = vmand %vm408, %vm409
        %v411 = vsub.s32 %v245, 48
        %v412 = vsel %vm408, %v411, %v385
        %v413 = vsel %vm410, 1, 0
        %vm414 = vcmp.eq.s32.totalorder %v413, 1
        %415 = vset.pattern.permute.xlu0 6
        %416 = vperm.xlu0 %415, %v240
        %v417 = vpop.permute.xlu0 %416
        %419 = vset.pattern.permute.xlu0 6
        %420 = vperm.xlu0 %419, %v241
        %v421 = vpop.permute.xlu0 %420
        %423 = vset.pattern.permute.xlu0 6
        %424 = vperm.xlu0 %423, %v242
        %v425 = vpop.permute.xlu0 %424
        %427 = vset.pattern.permute.xlu0 6
        %428 = vperm.xlu0 %427, %v243
        %v429 = vpop.permute.xlu0 %428
        %v431 = vsel %vm414, %v417, %v404
        %v432 = vsel %vm414, %v421, %v405
        %v433 = vsel %vm414, %v425, %v406
        %v434 = vsel %vm414, %v429, %v407
        %vm435 = vcmp.ge.s32.totalorder %v245, 56
        %vm436 = vcmp.lt.s32.totalorder %v245, 64
        %vm437 = vmand %vm435, %vm436
        %v438 = vsub.s32 %v245, 56
        %v439 = vsel %vm435, %v438, %v412
        %v440 = vsel %vm437, 1, 0
        %vm441 = vcmp.eq.s32.totalorder %v440, 1
        %442 = vset.pattern.permute.xlu0 7
        %443 = vperm.xlu0 %442, %v240
        %v444 = vpop.permute.xlu0 %443
        %446 = vset.pattern.permute.xlu0 7
        %447 = vperm.xlu0 %446, %v241
        %v448 = vpop.permute.xlu0 %447
        %450 = vset.pattern.permute.xlu0 7
        %451 = vperm.xlu0 %450, %v242
        %v452 = vpop.permute.xlu0 %451
        %454 = vset.pattern.permute.xlu0 7
        %455 = vperm.xlu0 %454, %v243
        %v456 = vpop.permute.xlu0 %455
        %v458 = vsel %vm441, %v444, %v431
        %v459 = vsel %vm441, %v448, %v432
        %v460 = vsel %vm441, %v452, %v433
        %v461 = vsel %vm441, %v456, %v434
        %vm462 = vcmp.ge.s32.totalorder %v245, 64
        %vm463 = vcmp.lt.s32.totalorder %v245, 72
        %vm464 = vmand %vm462, %vm463
        %v465 = vsub.s32 %v245, 64
        %v466 = vsel %vm462, %v465, %v439
        %v467 = vsel %vm464, 1, 0
        %vm468 = vcmp.eq.s32.totalorder %v467, 1
        %469 = vset.pattern.permute.xlu0 8
        %470 = vperm.xlu0 %469, %v240
        %v471 = vpop.permute.xlu0 %470
        %473 = vset.pattern.permute.xlu0 8
        %474 = vperm.xlu0 %473, %v241
        %v475 = vpop.permute.xlu0 %474
        %477 = vset.pattern.permute.xlu0 8
        %478 = vperm.xlu0 %477, %v242
        %v479 = vpop.permute.xlu0 %478
        %481 = vset.pattern.permute.xlu0 8
        %482 = vperm.xlu0 %481, %v243
        %v483 = vpop.permute.xlu0 %482
        %v485 = vsel %vm468, %v471, %v458
        %v486 = vsel %vm468, %v475, %v459
        %v487 = vsel %vm468, %v479, %v460
        %v488 = vsel %vm468, %v483, %v461
        %vm489 = vcmp.ge.s32.totalorder %v245, 72
        %vm490 = vcmp.lt.s32.totalorder %v245, 80
        %vm491 = vmand %vm489, %vm490
        %v492 = vsub.s32 %v245, 72
        %v493 = vsel %vm489, %v492, %v466
        %v494 = vsel %vm491, 1, 0
        %vm495 = vcmp.eq.s32.totalorder %v494, 1
        %496 = vset.pattern.permute.xlu0 9
        %497 = vperm.xlu0 %496, %v240
        %v498 = vpop.permute.xlu0 %497
        %500 = vset.pattern.permute.xlu0 9
        %501 = vperm.xlu0 %500, %v241
        %v502 = vpop.permute.xlu0 %501
        %504 = vset.pattern.permute.xlu0 9
        %505 = vperm.xlu0 %504, %v242
        %v506 = vpop.permute.xlu0 %505
        %508 = vset.pattern.permute.xlu0 9
        %509 = vperm.xlu0 %508, %v243
        %v510 = vpop.permute.xlu0 %509
        %v512 = vsel %vm495, %v498, %v485
        %v513 = vsel %vm495, %v502, %v486
        %v514 = vsel %vm495, %v506, %v487
        %v515 = vsel %vm495, %v510, %v488
        %vm516 = vcmp.ge.s32.totalorder %v245, 80
        %vm517 = vcmp.lt.s32.totalorder %v245, 88
        %vm518 = vmand %vm516, %vm517
        %v519 = vsub.s32 %v245, 80
        %v520 = vsel %vm516, %v519, %v493
        %v521 = vsel %vm518, 1, 0
        %vm522 = vcmp.eq.s32.totalorder %v521, 1
        %523 = vset.pattern.permute.xlu0 10
        %524 = vperm.xlu0 %523, %v240
        %v525 = vpop.permute.xlu0 %524
        %527 = vset.pattern.permute.xlu0 10
        %528 = vperm.xlu0 %527, %v241
        %v529 = vpop.permute.xlu0 %528
        %531 = vset.pattern.permute.xlu0 10
        %532 = vperm.xlu0 %531, %v242
        %v533 = vpop.permute.xlu0 %532
        %535 = vset.pattern.permute.xlu0 10
        %536 = vperm.xlu0 %535, %v243
        %v537 = vpop.permute.xlu0 %536
        %v539 = vsel %vm522, %v525, %v512
        %v540 = vsel %vm522, %v529, %v513
        %v541 = vsel %vm522, %v533, %v514
        %v542 = vsel %vm522, %v537, %v515
        %vm543 = vcmp.ge.s32.totalorder %v245, 88
        %vm544 = vcmp.lt.s32.totalorder %v245, 96
        %vm545 = vmand %vm543, %vm544
        %v546 = vsub.s32 %v245, 88
        %v547 = vsel %vm543, %v546, %v520
        %v548 = vsel %vm545, 1, 0
        %vm549 = vcmp.eq.s32.totalorder %v548, 1
        %550 = vset.pattern.permute.xlu0 11
        %551 = vperm.xlu0 %550, %v240
        %v552 = vpop.permute.xlu0 %551
        %554 = vset.pattern.permute.xlu0 11
        %555 = vperm.xlu0 %554, %v241
        %v556 = vpop.permute.xlu0 %555
        %558 = vset.pattern.permute.xlu0 11
        %559 = vperm.xlu0 %558, %v242
        %v560 = vpop.permute.xlu0 %559
        %562 = vset.pattern.permute.xlu0 11
        %563 = vperm.xlu0 %562, %v243
        %v564 = vpop.permute.xlu0 %563
        %v566 = vsel %vm549, %v552, %v539
        %v567 = vsel %vm549, %v556, %v540
        %v568 = vsel %vm549, %v560, %v541
        %v569 = vsel %vm549, %v564, %v542
        %vm570 = vcmp.ge.s32.totalorder %v245, 96
        %vm571 = vcmp.lt.s32.totalorder %v245, 104
        %vm572 = vmand %vm570, %vm571
        %v573 = vsub.s32 %v245, 96
        %v574 = vsel %vm570, %v573, %v547
        %v575 = vsel %vm572, 1, 0
        %vm576 = vcmp.eq.s32.totalorder %v575, 1
        %577 = vset.pattern.permute.xlu0 12
        %578 = vperm.xlu0 %577, %v240
        %v579 = vpop.permute.xlu0 %578
        %581 = vset.pattern.permute.xlu0 12
        %582 = vperm.xlu0 %581, %v241
        %v583 = vpop.permute.xlu0 %582
        %585 = vset.pattern.permute.xlu0 12
        %586 = vperm.xlu0 %585, %v242
        %v587 = vpop.permute.xlu0 %586
        %589 = vset.pattern.permute.xlu0 12
        %590 = vperm.xlu0 %589, %v243
        %v591 = vpop.permute.xlu0 %590
        %v593 = vsel %vm576, %v579, %v566
        %v594 = vsel %vm576, %v583, %v567
        %v595 = vsel %vm576, %v587, %v568
        %v596 = vsel %vm576, %v591, %v569
        %vm597 = vcmp.ge.s32.totalorder %v245, 104
        %vm598 = vcmp.lt.s32.totalorder %v245, 112
        %vm599 = vmand %vm597, %vm598
        %v600 = vsub.s32 %v245, 104
        %v601 = vsel %vm597, %v600, %v574
        %v602 = vsel %vm599, 1, 0
        %vm603 = vcmp.eq.s32.totalorder %v602, 1
        %604 = vset.pattern.permute.xlu0 13
        %605 = vperm.xlu0 %604, %v240
        %v606 = vpop.permute.xlu0 %605
        %608 = vset.pattern.permute.xlu0 13
        %609 = vperm.xlu0 %608, %v241
        %v610 = vpop.permute.xlu0 %609
        %612 = vset.pattern.permute.xlu0 13
        %613 = vperm.xlu0 %612, %v242
        %v614 = vpop.permute.xlu0 %613
        %616 = vset.pattern.permute.xlu0 13
        %617 = vperm.xlu0 %616, %v243
        %v618 = vpop.permute.xlu0 %617
        %v620 = vsel %vm603, %v606, %v593
        %v621 = vsel %vm603, %v610, %v594
        %v622 = vsel %vm603, %v614, %v595
        %v623 = vsel %vm603, %v618, %v596
        %vm624 = vcmp.ge.s32.totalorder %v245, 112
        %vm625 = vcmp.lt.s32.totalorder %v245, 120
        %vm626 = vmand %vm624, %vm625
        %v627 = vsub.s32 %v245, 112
        %v628 = vsel %vm624, %v627, %v601
        %v629 = vsel %vm626, 1, 0
        %vm630 = vcmp.eq.s32.totalorder %v629, 1
        %631 = vset.pattern.permute.xlu0 14
        %632 = vperm.xlu0 %631, %v240
        %v633 = vpop.permute.xlu0 %632
        %635 = vset.pattern.permute.xlu0 14
        %636 = vperm.xlu0 %635, %v241
        %v637 = vpop.permute.xlu0 %636
        %639 = vset.pattern.permute.xlu0 14
        %640 = vperm.xlu0 %639, %v242
        %v641 = vpop.permute.xlu0 %640
        %643 = vset.pattern.permute.xlu0 14
        %644 = vperm.xlu0 %643, %v243
        %v645 = vpop.permute.xlu0 %644
        %v647 = vsel %vm630, %v633, %v620
        %v648 = vsel %vm630, %v637, %v621
        %v649 = vsel %vm630, %v641, %v622
        %v650 = vsel %vm630, %v645, %v623
        %vm651 = vcmp.ge.s32.totalorder %v245, 120
        %vm652 = vcmp.lt.s32.totalorder %v245, 128
        %vm653 = vmand %vm651, %vm652
        %v654 = vsub.s32 %v245, 120
        %v655 = vsel %vm651, %v654, %v628
        %v656 = vsel %vm653, 1, 0
        %vm657 = vcmp.eq.s32.totalorder %v656, 1
        %658 = vset.pattern.permute.xlu0 15
        %659 = vperm.xlu0 %658, %v240
        %v660 = vpop.permute.xlu0 %659
        %662 = vset.pattern.permute.xlu0 15
        %663 = vperm.xlu0 %662, %v241
        %v664 = vpop.permute.xlu0 %663
        %666 = vset.pattern.permute.xlu0 15
        %667 = vperm.xlu0 %666, %v242
        %v668 = vpop.permute.xlu0 %667
        %670 = vset.pattern.permute.xlu0 15
        %671 = vperm.xlu0 %670, %v243
        %v672 = vpop.permute.xlu0 %671
        %v674 = vsel %vm657, %v660, %v647
        %v675 = vsel %vm657, %v664, %v648
        %v676 = vsel %vm657, %v668, %v649
        %v677 = vsel %vm657, %v672, %v650
        %vm678 = vcmp.ge.s32.totalorder %v655, 1
        %v679 = vsel %vm678, 1, 0
        %vm680 = vcmp.eq.s32.totalorder %v679, 1
        %v681 = vsel %vm680, %v674, 0.0
        %v682 = vsel %vm680, %v675, 0.0
        %v683 = vsel %vm680, %v676, 0.0
        %v684 = vsel %vm680, %v677, 0.0
        %685 = vrot.lane.b32.xlu0 %v232, 1
        %v686 = vpop.permute.xlu0 %685
        %687 = vrot.lane.b32.xlu0 %v233, 1
        %v688 = vpop.permute.xlu0 %687
        %689 = vrot.lane.b32.xlu0 %v234, 1
        %v690 = vpop.permute.xlu0 %689
        %691 = vrot.lane.b32.xlu0 %v235, 1
        %v692 = vpop.permute.xlu0 %691
        %693 = vrot.lane.b32.xlu0 %v236, 1
        %v694 = vpop.permute.xlu0 %693
        %695 = vrot.lane.b32.xlu0 %v237, 1
        %v696 = vpop.permute.xlu0 %695
        %697 = vrot.lane.b32.xlu0 %v238, 1
        %v698 = vpop.permute.xlu0 %697
        %699 = vrot.lane.b32.xlu0 %v239, 1
        %v700 = vpop.permute.xlu0 %699
        %v701 = vmul.f32 %v681, %v686
        %v702 = vmul.f32 %v682, %v688
        %v703 = vmul.f32 %v683, %v690
        %v704 = vmul.f32 %v684, %v692
        %v705 = vmul.f32 %v681, %v694
        %v706 = vmul.f32 %v682, %v696
        %v707 = vmul.f32 %v683, %v698
        %v708 = vmul.f32 %v684, %v700
        %v709 = vadd.f32 %v232, %v701
        %v710 = vadd.f32 %v233, %v702
        %v711 = vadd.f32 %v234, %v703
        %v712 = vadd.f32 %v235, %v704
        %v713 = vadd.f32 %v236, %v705
        %v714 = vadd.f32 %v237, %v706
        %v715 = vadd.f32 %v238, %v707
        %v716 = vadd.f32 %v239, %v708
        %v717 = vmul.f32 %v674, %v674
        %v718 = vmul.f32 %v675, %v675
        %v719 = vmul.f32 %v676, %v676
        %v720 = vmul.f32 %v677, %v677
        %vm721 = vcmp.ge.s32.totalorder %v655, 2
        %v722 = vsel %vm721, 1, 0
        %vm723 = vcmp.eq.s32.totalorder %v722, 1
        %v724 = vsel %vm723, %v717, 0.0
        %v725 = vsel %vm723, %v718, 0.0
        %v726 = vsel %vm723, %v719, 0.0
        %v727 = vsel %vm723, %v720, 0.0
        %728 = vrot.lane.b32.xlu0 %v709, 2
        %v729 = vpop.permute.xlu0 %728
        %730 = vrot.lane.b32.xlu0 %v710, 2
        %v731 = vpop.permute.xlu0 %730
        %732 = vrot.lane.b32.xlu0 %v711, 2
        %v733 = vpop.permute.xlu0 %732
        %734 = vrot.lane.b32.xlu0 %v712, 2
        %v735 = vpop.permute.xlu0 %734
        %736 = vrot.lane.b32.xlu0 %v713, 2
        %v737 = vpop.permute.xlu0 %736
        %738 = vrot.lane.b32.xlu0 %v714, 2
        %v739 = vpop.permute.xlu0 %738
        %740 = vrot.lane.b32.xlu0 %v715, 2
        %v741 = vpop.permute.xlu0 %740
        %742 = vrot.lane.b32.xlu0 %v716, 2
        %v743 = vpop.permute.xlu0 %742
        %v744 = vmul.f32 %v724, %v729
        %v745 = vmul.f32 %v725, %v731
        %v746 = vmul.f32 %v726, %v733
        %v747 = vmul.f32 %v727, %v735
        %v748 = vmul.f32 %v724, %v737
        %v749 = vmul.f32 %v725, %v739
        %v750 = vmul.f32 %v726, %v741
        %v751 = vmul.f32 %v727, %v743
        %v752 = vadd.f32 %v709, %v744
        %v753 = vadd.f32 %v710, %v745
        %v754 = vadd.f32 %v711, %v746
        %v755 = vadd.f32 %v712, %v747
        %v756 = vadd.f32 %v713, %v748
        %v757 = vadd.f32 %v714, %v749
        %v758 = vadd.f32 %v715, %v750
        %v759 = vadd.f32 %v716, %v751
        %v760 = vmul.f32 %v717, %v717
        %v761 = vmul.f32 %v718, %v718
        %v762 = vmul.f32 %v719, %v719
        %v763 = vmul.f32 %v720, %v720
        %vm764 = vcmp.ge.s32.totalorder %v655, 4
        %v765 = vsel %vm764, 1, 0
        %vm766 = vcmp.eq.s32.totalorder %v765, 1
        %v767 = vsel %vm766, %v760, 0.0
        %v768 = vsel %vm766, %v761, 0.0
        %v769 = vsel %vm766, %v762, 0.0
        %v770 = vsel %vm766, %v763, 0.0
        %771 = vrot.lane.b32.xlu0 %v752, 4
        %v772 = vpop.permute.xlu0 %771
        %773 = vrot.lane.b32.xlu0 %v753, 4
        %v774 = vpop.permute.xlu0 %773
        %775 = vrot.lane.b32.xlu0 %v754, 4
        %v776 = vpop.permute.xlu0 %775
        %777 = vrot.lane.b32.xlu0 %v755, 4
        %v778 = vpop.permute.xlu0 %777
        %779 = vrot.lane.b32.xlu0 %v756, 4
        %v780 = vpop.permute.xlu0 %779
        %781 = vrot.lane.b32.xlu0 %v757, 4
        %v782 = vpop.permute.xlu0 %781
        %783 = vrot.lane.b32.xlu0 %v758, 4
        %v784 = vpop.permute.xlu0 %783
        %785 = vrot.lane.b32.xlu0 %v759, 4
        %v786 = vpop.permute.xlu0 %785
        %v787 = vmul.f32 %v767, %v772
        %v788 = vmul.f32 %v768, %v774
        %v789 = vmul.f32 %v769, %v776
        %v790 = vmul.f32 %v770, %v778
        %v791 = vmul.f32 %v767, %v780
        %v792 = vmul.f32 %v768, %v782
        %v793 = vmul.f32 %v769, %v784
        %v794 = vmul.f32 %v770, %v786
        %v795 = vadd.f32 %v752, %v787
        %v796 = vadd.f32 %v753, %v788
        %v797 = vadd.f32 %v754, %v789
        %v798 = vadd.f32 %v755, %v790
        %v799 = vadd.f32 %v756, %v791
        %v800 = vadd.f32 %v757, %v792
        %v801 = vadd.f32 %v758, %v793
        %v802 = vadd.f32 %v759, %v794
        %803 = vst [vmem:[%s221] sm:$0xff] %v795
        %804 = vst [vmem:[%s221 + $0x8] sm:$0xff] %v796
        %805 = vst [vmem:[%s221 + $0x10] sm:$0xff] %v797
        %806 = vst [vmem:[%s221 + $0x18] sm:$0xff] %v798
        %807 = vst [vmem:[%s221 + $0x20] sm:$0xff] %v799
        %808 = vst [vmem:[%s221 + $0x28] sm:$0xff] %v800
        %809 = vst [vmem:[%s221 + $0x30] sm:$0xff] %v801
        %810 = vst [vmem:[%s221 + $0x38] sm:$0xff] %v802
        %s811 = sand.u32 %s95, 1
        %s812 = scalar_lea.sflag [#allocation4], %s811
        %s813 = sand.u32 %s95, 1
        %s814 = smul.addr %s813, 64
        %s815 = scalar_lea.vmem [#allocation5], %s814
        // Predicated region
        $region33: #{tpu_custom_call.1} parent=27 // pred_check
          %p816 = pneg %p105
        $region34: #{tpu_custom_call.1} parent=27 // pred_check_branch
          %818 = sbr.rel (%p816) target = $region36
        $region35: #{tpu_custom_call.1} parent=27 // pred_region
          #allocation9 [shape = 'u32[6]{0}', space=smem, size = 0x18, scoped, tag = 'DMA stride descriptor']
          %s819 = smul.u32 2, %s24
          %s820 = smul.u32 4, %s23
          %s822 = ssub.s32 1024, 1024
          %823 = vsyncadd %s812, %s822
          %s824 = smul.addr %s819, 8
          %s825 = sadd.s32 %s820, %s824
          %s826 = smul.addr %s825, 128
          %s827 = scalar_lea.hbm %s2, %s826
          %s829 = sshll.u32 1, 14
          %s830 = sxor.u32 4294967295, %s829
          %s833 = sshll.u32 7, 18
          %s834 = sxor.u32 4294967295, %s833
          %s835 = sand.u32 0, %s834
          %s837 = sor.u32 %s835, 0
          %s839 = sshll.u32 3, 24
          %s840 = sxor.u32 4294967295, %s839
          %s841 = sand.u32 %s837, %s840
          %s843 = sor.u32 %s841, 0
          %s844 = sshll.u32 %s815, 4
          %s845 = int_to_ptr.vmem [resolvable:$true] %s844
          %851 = sst [smem:[#allocation9]] 512
          %s852 = scalar_lea.smem [#allocation9], 1
          %853 = sst [smem:[%s852]] 1024
          %s854 = scalar_lea.smem [#allocation9], 2
          %855 = sst [smem:[%s854]] 4
          %s856 = scalar_lea.smem [#allocation9], 3
          %857 = sst [smem:[%s856]] 128
          %s858 = scalar_lea.smem [#allocation9], 4
          %859 = sst [smem:[%s858]] 128
          %s860 = scalar_lea.smem [#allocation9], 5
          %861 = sst [smem:[%s860]] 8
          %863 = dma.general %s845, 1024, %s827, %s812, [#allocation8], [#allocation9], %s843, 0
        $region36: #{tpu_custom_call.1} parent=27 // pred_fallthru
          _
      $region28: #{tpu_custom_call.1} parent=5 // pred_fallthru
        _
      %p864 = scmp.le.s32.totalorder 2, %s14
      // Predicated region
      $region37: #{tpu_custom_call.1} parent=5 // pred_check
        %p865 = pneg %p864
      $region38: #{tpu_custom_call.1} parent=5 // pred_check_branch
        %867 = sbr.rel (%p865) target = $region40
      $region39: #{tpu_custom_call.1} parent=5 // pred_region
        %s868 = ssub.s32 %s14, 2
        // Predicated region
        $region41: #{tpu_custom_call.1} parent=39 // pred_check
          %p869 = pneg %p111
        $region42: #{tpu_custom_call.1} parent=39 // pred_check_branch
          %871 = sbr.rel (%p869) target = $region44
        $region43: #{tpu_custom_call.1} parent=39 // pred_region
          %s872 = sand.u32 %s96, 1
          %s873 = scalar_lea.sflag [#allocation4], %s872
          %s874 = sand.u32 %s96, 1
          %s875 = smul.addr %s874, 64
          %s876 = scalar_lea.vmem [#allocation5], %s875
          %877 = dma.done %s873, 1024
        $region44: #{tpu_custom_call.1} parent=39 // pred_fallthru
          _
      $region40: #{tpu_custom_call.1} parent=5 // pred_fallthru
        _
    $region6: #{tpu_custom_call.1} parent=1 // loop_footer
      %s18 = sadd.s32 1, %s14
    $region7: #{tpu_custom_call.1} parent=1 // loop_footer_branch
      %13 = sbr.rel target = $region3
    $region8: #{tpu_custom_call.1} parent=1 // loop_exit
      _
    %878 = vsyncpa [#allocation3], 1
    %s879 = scalar_lea.sflag [#allocation3], 1
    %880 = vsyncpa %s879, 1
    %881 = vsyncpa [#allocation4], 1
    %s882 = scalar_lea.sflag [#allocation4], 1
    %883 = vsyncpa %s882, 1

</llo_original>
